<compile_context>
chip_gen: v6e
topology: v6e:2x2x1
jax: 0.10.0
libtpu: 0.0.40
codegen_flags: <defaults>
</compile_context>

<pallas_src>
import jax
import jax.numpy as jnp
from jax.experimental import pallas as pl
from jax.experimental.pallas import tpu as pltpu


def _policy_kernel(x_ref, p_ref, wh_ref, out_ref):
    x = x_ref[...]                     # (B, 4)    f32
    w1 = p_ref[0:4, :]                 # (4, 128)  f32   (rows 0-3 of packed block)
    b1 = p_ref[4:5, :]                 # (1, 128)  f32   (row 4)
    bh = p_ref[5:6, 0:3]               # (1, 3)    f32   (row 5, lanes 0-2)

    # ---- affine1 + ReLU on the VPU: 4 broadcast FMAs, no MXU round-trip ----
    h = b1                                            # broadcasts over B
    h = h + x[:, 0:1] * w1[0:1, :]
    h = h + x[:, 1:2] * w1[1:2, :]
    h = h + x[:, 2:3] * w1[2:3, :]
    h = h + x[:, 3:4] * w1[3:4, :]
    h = jnp.maximum(h, 0.0)                           # (B, 128)

    # ---- fused heads: one (128, 3) MXU matmul -> [s0-s1, s1-s0, value] ----
    scores = jnp.dot(h, wh_ref[...], preferred_element_type=jnp.float32)
    scores = scores + bh                              # (B, 3)

    # ---- purely lanewise epilogue ----
    # lanes 0,1: sigmoid(+/- logit gap) == 2-class softmax probs (full rel.
    # precision for both, no overflow); lane 2: value passes through.
    lane = jax.lax.broadcasted_iota(jnp.int32, scores.shape, dimension=1)
    sig = 1.0 / (1.0 + jnp.exp(-scores))              # exp rides the EUP slot
    out_ref[...] = jnp.where(lane < 2, sig, scores)   # single (B, 3) store


def policy_forward(x, packed_params, w_heads):
    """x: (B, 4) f32.  packed_params: (8, 128) f32.  w_heads: (128, 3) f32.

    Returns (action_probs (B, 2), state_values (B, 1)).
    """
    B = x.shape[0]
    flops = 2 * B * 4 * 128 + 2 * B * 128 * 3 + 8 * B
    bytes_accessed = 4 * (x.size + packed_params.size + w_heads.size + B * 3)
    out = pl.pallas_call(
        _policy_kernel,
        out_shape=jax.ShapeDtypeStruct((B, 3), jnp.float32),
        in_specs=[pl.BlockSpec(memory_space=pltpu.VMEM)] * 3,
        out_specs=pl.BlockSpec(memory_space=pltpu.VMEM),
        cost_estimate=pl.CostEstimate(
            flops=flops, transcendentals=2 * B, bytes_accessed=bytes_accessed),
    )(x, packed_params, w_heads)
    return out[:, :2], out[:, 2:3]
    # TODO(synk): for large batches (vectorized envs) add a 1-D grid over the
    # batch (tile >= 256 rows, weights index_map -> (0, 0)) with
    # dimension_semantics=("parallel",) so both v7x TensorCores are used.


def init_params(key):
    """Deterministic synthetic init matching nn.Linear shapes (stored (in, out))."""
    k1, k2, k3, k4, k5, k6 = jax.random.split(key, 6)
    # PyTorch default init scale ~ U(-1/sqrt(fan_in), 1/sqrt(fan_in))
    w1 = jax.random.uniform(k1, (4, 128), jnp.float32, -0.5, 0.5)
    b1 = jax.random.uniform(k2, (1, 128), jnp.float32, -0.5, 0.5)
    s = 1.0 / jnp.sqrt(128.0)
    wa = jax.random.uniform(k3, (128, 2), jnp.float32, -s, s)
    ba = jax.random.uniform(k4, (1, 2), jnp.float32, -s, s)
    wv = jax.random.uniform(k5, (128, 1), jnp.float32, -s, s)
    bv = jax.random.uniform(k6, (1, 1), jnp.float32, -s, s)
    return w1, b1, wa, ba, wv, bv


def pack_params(w1, b1, wa, ba, wv, bv):
    """One-time packing.

    Returns:
      packed (8, 128): rows 0-3 = w1, row 4 = b1, row 5 = fused head bias
                       [ba0-ba1, ba1-ba0, bv] zero-padded to 128 lanes.
      w_heads (128, 3): [Wa0-Wa1 | Wa1-Wa0 | Wv]  (differenced action columns
                       so the kernel epilogue is elementwise sigmoid).
    """
    w_heads = jnp.concatenate(
        [wa[:, 0:1] - wa[:, 1:2], wa[:, 1:2] - wa[:, 0:1], wv], axis=1)
    b_heads = jnp.concatenate(
        [ba[:, 0:1] - ba[:, 1:2], ba[:, 1:2] - ba[:, 0:1], bv], axis=1)
    packed = jnp.zeros((8, 128), jnp.float32)
    packed = packed.at[0:4, :].set(w1)
    packed = packed.at[4, :].set(b1[0])
    packed = packed.at[5, 0:3].set(b_heads[0])
    return packed, w_heads


def _reference(x, w1, b1, wa, ba, wv, bv):
    h = jnp.maximum(x @ w1 + b1, 0.0)
    probs = jax.nn.softmax(h @ wa + ba, axis=-1)
    values = h @ wv + bv
    return probs, values


if __name__ == "__main__":
    key = jax.random.PRNGKey(0)
    kx, kp = jax.random.split(key)

    B = 8  # batch of CartPole-style states, each with 4 features
    x = jax.random.normal(kx, (B, 4), dtype=jnp.float32)
    w1, b1, wa, ba, wv, bv = init_params(kp)
    packed_params, w_heads = pack_params(w1, b1, wa, ba, wv, bv)

    probs, values = policy_forward(x, packed_params, w_heads)
    jax.block_until_ready((probs, values))

    # sanity check vs pure-JAX reference of the original (unfused) module
    ref_probs, ref_values = _reference(x, w1, b1, wa, ba, wv, bv)
    assert probs.shape == (B, 2) and values.shape == (B, 1)
    assert jnp.allclose(probs, ref_probs, atol=1e-5)
    assert jnp.allclose(values, ref_values, atol=1e-5)
    assert jnp.allclose(jnp.sum(probs, axis=-1), 1.0, atol=1e-5)

    print("KERNEL_OK")
</pallas_src>

<mosaic_0001>
module attributes {stable_mosaic.version = 11 : i64} {
  func.func @_policy_kernel(%arg0: memref<8x4xf32, #tpu.memory_space<vmem>>, %arg1: memref<8x128xf32, #tpu.memory_space<vmem>>, %arg2: memref<128x3xf32, #tpu.memory_space<vmem>>, %arg3: memref<8x3xf32, #tpu.memory_space<vmem>>) attributes {dimension_semantics = [], scalar_prefetch = 0 : i64, scratch_operands = 0 : i64, tpu.core_type = #tpu.core_type<tc>} {
    %c0 = arith.constant 0 : index
    %c0_0 = arith.constant 0 : index
    %0 = vector.load %arg0[%c0, %c0_0] : memref<8x4xf32, #tpu.memory_space<vmem>>, vector<8x4xf32>
    %c0_1 = arith.constant 0 : index
    %c0_2 = arith.constant 0 : index
    %1 = vector.load %arg1[%c0_1, %c0_2] : memref<8x128xf32, #tpu.memory_space<vmem>>, vector<4x128xf32>
    %c4 = arith.constant 4 : index
    %c0_3 = arith.constant 0 : index
    %2 = vector.load %arg1[%c4, %c0_3] : memref<8x128xf32, #tpu.memory_space<vmem>>, vector<1x128xf32>
    %c5 = arith.constant 5 : index
    %c0_4 = arith.constant 0 : index
    %3 = vector.load %arg1[%c5, %c0_4] : memref<8x128xf32, #tpu.memory_space<vmem>>, vector<1x3xf32>
    %4 = vector.extract_strided_slice %0 {offsets = [0, 0], sizes = [8, 1], strides = [1, 1]} : vector<8x4xf32> to vector<8x1xf32>
    %5 = vector.extract_strided_slice %1 {offsets = [0, 0], sizes = [1, 128], strides = [1, 1]} : vector<4x128xf32> to vector<1x128xf32>
    %6 = vector.broadcast %4 : vector<8x1xf32> to vector<8x128xf32>
    %7 = vector.broadcast %5 : vector<1x128xf32> to vector<8x128xf32>
    %8 = arith.mulf %6, %7 : vector<8x128xf32>
    %9 = vector.broadcast %2 : vector<1x128xf32> to vector<8x128xf32>
    %10 = arith.addf %9, %8 : vector<8x128xf32>
    %11 = vector.extract_strided_slice %0 {offsets = [0, 1], sizes = [8, 1], strides = [1, 1]} : vector<8x4xf32> to vector<8x1xf32>
    %12 = vector.extract_strided_slice %1 {offsets = [1, 0], sizes = [1, 128], strides = [1, 1]} : vector<4x128xf32> to vector<1x128xf32>
    %13 = vector.broadcast %11 : vector<8x1xf32> to vector<8x128xf32>
    %14 = vector.broadcast %12 : vector<1x128xf32> to vector<8x128xf32>
    %15 = arith.mulf %13, %14 : vector<8x128xf32>
    %16 = arith.addf %10, %15 : vector<8x128xf32>
    %17 = vector.extract_strided_slice %0 {offsets = [0, 2], sizes = [8, 1], strides = [1, 1]} : vector<8x4xf32> to vector<8x1xf32>
    %18 = vector.extract_strided_slice %1 {offsets = [2, 0], sizes = [1, 128], strides = [1, 1]} : vector<4x128xf32> to vector<1x128xf32>
    %19 = vector.broadcast %17 : vector<8x1xf32> to vector<8x128xf32>
    %20 = vector.broadcast %18 : vector<1x128xf32> to vector<8x128xf32>
    %21 = arith.mulf %19, %20 : vector<8x128xf32>
    %22 = arith.addf %16, %21 : vector<8x128xf32>
    %23 = vector.extract_strided_slice %0 {offsets = [0, 3], sizes = [8, 1], strides = [1, 1]} : vector<8x4xf32> to vector<8x1xf32>
    %24 = vector.extract_strided_slice %1 {offsets = [3, 0], sizes = [1, 128], strides = [1, 1]} : vector<4x128xf32> to vector<1x128xf32>
    %25 = vector.broadcast %23 : vector<8x1xf32> to vector<8x128xf32>
    %26 = vector.broadcast %24 : vector<1x128xf32> to vector<8x128xf32>
    %27 = arith.mulf %25, %26 : vector<8x128xf32>
    %28 = arith.addf %22, %27 : vector<8x128xf32>
    %cst = arith.constant 0.000000e+00 : f32
    %29 = vector.broadcast %cst : f32 to vector<8x128xf32>
    %30 = arith.maximumf %28, %29 : vector<8x128xf32>
    %c0_5 = arith.constant 0 : index
    %c0_6 = arith.constant 0 : index
    %31 = vector.load %arg2[%c0_5, %c0_6] : memref<128x3xf32, #tpu.memory_space<vmem>>, vector<128x3xf32>
    %cst_7 = arith.constant dense<0.000000e+00> : vector<8x3xf32>
    %32 = tpu.matmul %30, %31, %cst_7 {dimension_numbers = #tpu.dot_dimension_numbers<[1], [0], [0], [1], [0, 0, 1, 1], [], []>} : vector<8x128xf32>, vector<128x3xf32>, vector<8x3xf32> -> vector<8x3xf32>
    %33 = vector.broadcast %3 : vector<1x3xf32> to vector<8x3xf32>
    %34 = arith.addf %32, %33 : vector<8x3xf32>
    %35 = tpu.iota {dimensions = array<i32: 1>} : vector<8x3xi32>
    %cst_8 = arith.constant 0.000000e+00 : f32
    %36 = vector.broadcast %cst_8 : f32 to vector<8x3xf32>
    %37 = arith.subf %36, %34 : vector<8x3xf32>
    %38 = math.exp %37 : vector<8x3xf32>
    %cst_9 = arith.constant 1.000000e+00 : f32
    %39 = vector.broadcast %cst_9 : f32 to vector<8x3xf32>
    %40 = arith.addf %39, %38 : vector<8x3xf32>
    %cst_10 = arith.constant 1.000000e+00 : f32
    %41 = vector.broadcast %cst_10 : f32 to vector<8x3xf32>
    %42 = arith.divf %41, %40 : vector<8x3xf32>
    %c2_i32 = arith.constant 2 : i32
    %43 = vector.broadcast %c2_i32 : i32 to vector<8x3xi32>
    %44 = arith.cmpi slt, %35, %43 : vector<8x3xi32>
    %45 = arith.select %44, %42, %34 : vector<8x3xi1>, vector<8x3xf32>
    %c0_11 = arith.constant 0 : index
    %c0_12 = arith.constant 0 : index
    %46 = vector.load %arg3[%c0_11, %c0_12] : memref<8x3xf32, #tpu.memory_space<vmem>>, vector<8x3xf32>
    tpu.vector_store %arg3[%c0_11, %c0_12], %45 {strides = array<i32>} : memref<8x3xf32, #tpu.memory_space<vmem>>, vector<8x3xf32>,
    return
  }
}

</mosaic_0001>

<llo_original>
// kernel: tpu_custom_call.1
$region0: #{tpu_custom_call.1}
  #allocation0 [shape = 'u32[]', space=smem, size = 0x4, offset = 0x4, fixed_abs, tag = 'smem constant byte address 0x4 - core index']
  #allocation1 [shape = 'u32[144,128]{1,0:T(1,128)}', space=vmem, size = 0x12000, scoped, tag = 'internal scratch']
  %s0 = inlined_call_operand.vmem [shape: f32[8,4], index: 0, kind: input, shape index: {}]
  %s1 = inlined_call_operand.vmem [shape: f32[8,128], index: 1, kind: input, shape index: {}]
  %s2 = inlined_call_operand.vmem [shape: f32[128,3], index: 2, kind: input, shape index: {}]
  %s3 = inlined_call_operand.vmem [shape: f32[8,3], index: 3, kind: output, shape index: {}]
  %s4 = sld [smem:[#allocation0]]
  $region22: #{tpu_custom_call.1} parent=0
    _
  %s6 = ssub.s32 1, %s4
  %s7 = scalar_select 0, %s6, %s4
  // Predicated region
  $region2: #{tpu_custom_call.1} parent=0 // pred_check
    _
  $region3: #{tpu_custom_call.1} parent=0 // pred_check_branch
    %9 = sbr.rel (0) target = $region5
  $region4: #{tpu_custom_call.1} parent=0 // pred_region
    _
  $region5: #{tpu_custom_call.1} parent=0 // pred_fallthru
    _
  // Predicated region
  $region6: #{tpu_custom_call.1} parent=0 // pred_check
    _
  $region7: #{tpu_custom_call.1} parent=0 // pred_check_branch
    %11 = sbr.rel (0) target = $region9
  $region8: #{tpu_custom_call.1} parent=0 // pred_region
    _
  $region9: #{tpu_custom_call.1} parent=0 // pred_fallthru
    _
  // Predicated region
  $region10: #{tpu_custom_call.1} parent=0 // pred_check
    _
  $region11: #{tpu_custom_call.1} parent=0 // pred_check_branch
    %13 = sbr.rel (0) target = $region13
  $region12: #{tpu_custom_call.1} parent=0 // pred_region
    _
  $region13: #{tpu_custom_call.1} parent=0 // pred_fallthru
    _
  %v14 = vld [vmem:[%s0] sm:$0xff]
  %v15 = vld [vmem:[%s1] sm:$0xf]
  %v16 = vld [vmem:[%s1 + $0x4] sm:$0x1]
  %v17 = vld [vmem:[%s1 + $0x5] sm:$0x1]
  %19 = vset.pattern.permute.xlu0 0
  %20 = vperm.xlu0 %19, %v14
  %v21 = vpop.permute.xlu0 %20
  %v23 = vlaneseq
  %v24 = vshrl.u32 %v23, 7
  %v25 = vsub.s32 0, %v24
  %v26 = vrot.slane %v15, %v25
  %v27 = vmul.f32 %v21, %v26
  %v28 = vlaneseq
  %v29 = vshrl.u32 %v28, 7
  %v30 = vsub.s32 0, %v29
  %v31 = vrot.slane %v16, %v30
  %v32 = vadd.f32 %v31, %v27
  %33 = vset.pattern.permute.xlu0 1
  %34 = vperm.xlu0 %33, %v14
  %v35 = vpop.permute.xlu0 %34
  %v37 = vlaneseq
  %v38 = vshrl.u32 %v37, 7
  %v39 = vsub.s32 1, %v38
  %v40 = vrot.slane %v15, %v39
  %v41 = vmul.f32 %v35, %v40
  %v42 = vadd.f32 %v32, %v41
  %43 = vset.pattern.permute.xlu0 2
  %44 = vperm.xlu0 %43, %v14
  %v45 = vpop.permute.xlu0 %44
  %v47 = vlaneseq
  %v48 = vshrl.u32 %v47, 7
  %v49 = vsub.s32 2, %v48
  %v50 = vrot.slane %v15, %v49
  %v51 = vmul.f32 %v45, %v50
  %v52 = vadd.f32 %v42, %v51
  %53 = vset.pattern.permute.xlu0 3
  %54 = vperm.xlu0 %53, %v14
  %v55 = vpop.permute.xlu0 %54
  %v57 = vlaneseq
  %v58 = vshrl.u32 %v57, 7
  %v59 = vsub.s32 3, %v58
  %v60 = vrot.slane %v15, %v59
  %v61 = vmul.f32 %v55, %v60
  %v62 = vadd.f32 %v52, %v61
  %v63 = vmax.f32 %v62, 0.0
  %v64 = vld [vmem:[%s2] sm:$0xff]
  %v65 = vld [vmem:[%s2 + $0x8] sm:$0xff]
  %v66 = vld [vmem:[%s2 + $0x10] sm:$0xff]
  %v67 = vld [vmem:[%s2 + $0x18] sm:$0xff]
  %v68 = vld [vmem:[%s2 + $0x20] sm:$0xff]
  %v69 = vld [vmem:[%s2 + $0x28] sm:$0xff]
  %v70 = vld [vmem:[%s2 + $0x30] sm:$0xff]
  %v71 = vld [vmem:[%s2 + $0x38] sm:$0xff]
  %v72 = vld [vmem:[%s2 + $0x40] sm:$0xff]
  %v73 = vld [vmem:[%s2 + $0x48] sm:$0xff]
  %v74 = vld [vmem:[%s2 + $0x50] sm:$0xff]
  %v75 = vld [vmem:[%s2 + $0x58] sm:$0xff]
  %v76 = vld [vmem:[%s2 + $0x60] sm:$0xff]
  %v77 = vld [vmem:[%s2 + $0x68] sm:$0xff]
  %v78 = vld [vmem:[%s2 + $0x70] sm:$0xff]
  %v79 = vld [vmem:[%s2 + $0x78] sm:$0xff]
  %v80 = vlaneseq
  %v81 = vshrl.u32 %v80, 7
  %v82 = vsub.s32 0, %v81
  %v83 = vrot.slane %v17, %v82
  %84 = vmatprep.subr.mxu0 0.0
  %85 = vmatpush1.msra.mxu0 %v79
  %86 = vmatprep.subr.mxu0 0.0
  %87 = vmatpush1.msra.mxu0 %v78
  %88 = vmatprep.subr.mxu0 0.0
  %89 = vmatpush1.msra.mxu0 %v77
  %90 = vmatprep.subr.mxu0 0.0
  %91 = vmatpush1.msra.mxu0 %v76
  %92 = vmatprep.subr.mxu0 0.0
  %93 = vmatpush1.msra.mxu0 %v75
  %94 = vmatprep.subr.mxu0 0.0
  %95 = vmatpush1.msra.mxu0 %v74
  %96 = vmatprep.subr.mxu0 0.0
  %97 = vmatpush1.msra.mxu0 %v73
  %98 = vmatprep.subr.mxu0 0.0
  %99 = vmatpush1.msra.mxu0 %v72
  %100 = vmatprep.subr.mxu0 0.0
  %101 = vmatpush1.msra.mxu0 %v71
  %102 = vmatprep.subr.mxu0 0.0
  %103 = vmatpush1.msra.mxu0 %v70
  %104 = vmatprep.subr.mxu0 0.0
  %105 = vmatpush1.msra.mxu0 %v69
  %106 = vmatprep.subr.mxu0 0.0
  %107 = vmatpush1.msra.mxu0 %v68
  %108 = vmatprep.subr.mxu0 0.0
  %109 = vmatpush1.msra.mxu0 %v67
  %110 = vmatprep.subr.mxu0 0.0
  %111 = vmatpush1.msra.mxu0 %v66
  %112 = vmatprep.subr.mxu0 0.0
  %113 = vmatpush1.msra.mxu0 %v65
  %114 = vmatprep.subr.mxu0 0.0
  %115 = vmatpush1.msra.mxu0 %v64
  %116 = vmatprep.subr.mxu0 0.0
  %117 = vmatpush2.msra.mxu0 0.0
  %118 = vmatprep.subr.mxu0 0.0
  %119 = vmatpush2.msra.mxu0 0.0
  %120 = vmatprep.subr.mxu0 0.0
  %121 = vmatpush2.msra.mxu0 0.0
  %122 = vmatprep.subr.mxu0 0.0
  %123 = vmatpush2.msra.mxu0 0.0
  %124 = vmatprep.subr.mxu0 0.0
  %125 = vmatpush2.msra.mxu0 0.0
  %126 = vmatprep.subr.mxu0 0.0
  %127 = vmatpush2.msra.mxu0 0.0
  %128 = vmatprep.subr.mxu0 0.0
  %129 = vmatpush2.msra.mxu0 0.0
  %130 = vmatprep.subr.mxu0 0.0
  %131 = vmatpush2.msra.mxu0 0.0
  %132 = vmatprep.subr.mxu0 0.0
  %133 = vmatpush2.msra.mxu0 0.0
  %134 = vmatprep.subr.mxu0 0.0
  %135 = vmatpush2.msra.mxu0 0.0
  %136 = vmatprep.subr.mxu0 0.0
  %137 = vmatpush2.msra.mxu0 0.0
  %138 = vmatprep.subr.mxu0 0.0
  %139 = vmatpush2.msra.mxu0 0.0
  %140 = vmatprep.subr.mxu0 0.0
  %141 = vmatpush2.msra.mxu0 0.0
  %142 = vmatprep.subr.mxu0 0.0
  %143 = vmatpush2.msra.mxu0 0.0
  %144 = vmatprep.subr.mxu0 0.0
  %145 = vmatpush2.msra.mxu0 0.0
  %146 = vmatprep.subr.mxu0 0.0
  %147 = vmatpush2.msra.mxu0 0.0
  %148 = vmatprep.mubr.f32.mxu0 0.0
  %149 = vmatmul.mubr.f32.gmra.mxu0 %v63
  %v150 = vpop.f32.mrf.mxu0
  %v151 = vadd.f32 %v83, %v150
  %v152 = vpop.f32.mrf.mxu0
  %153 = vdwg.mxu0
  %v154 = vlaneseq
  %v155 = vand.u32 %v154, 127
  %v156 = vsub.f32 0.0, %v151
  %v157 = vmul.f32 %v156, 1.442695
  %v158 = vpow.pop %v157
  %v159 = vadd.f32 %v158, 1.0
  %v160 = vrcp.pop %v159
  %v161 = vmul.f32 1.0, %v160
  %vm162 = vcmp.lt.s32.totalorder %v155, 2
  %v163 = vsel %vm162, %v161, %v151
  %vm164 = vcmask 23552
  %165 = vst.msk [vmem:[%s3] sm:$0xff] %vm164, %v163
  // Predicated region
  $region14: #{tpu_custom_call.1} parent=0 // pred_check
    _
  $region15: #{tpu_custom_call.1} parent=0 // pred_check_branch
    %167 = sbr.rel (0) target = $region17
  $region16: #{tpu_custom_call.1} parent=0 // pred_region
    _
  $region17: #{tpu_custom_call.1} parent=0 // pred_fallthru
    _
  // Predicated region
  $region18: #{tpu_custom_call.1} parent=0 // pred_check
    _
  $region19: #{tpu_custom_call.1} parent=0 // pred_check_branch
    %169 = sbr.rel (0) target = $region21
  $region20: #{tpu_custom_call.1} parent=0 // pred_region
    _
  $region21: #{tpu_custom_call.1} parent=0 // pred_fallthru
    _

</llo_original>
